<compile_context>
chip_gen: v6e
topology: v6e:2x2x1
jax: 0.10.0
libtpu: 0.0.40
codegen_flags: <defaults>
</compile_context>

<pallas_src>
import jax
import jax.numpy as jnp
from jax.experimental import pallas as pl
from jax.experimental.pallas import tpu as pltpu

HIDDEN = 15
_VMEM_LIMIT = 32 << 20    # requested scoped VMEM (fits v5e/v6e/v7x physical)
_VMEM_BUDGET = 24 << 20   # what we plan against (headroom for compiler scratch)


def _round_up(v, m):
    return (v + m - 1) // m * m


def generator_kernel(alpha_ref, x_ref, w1_ref, b1_ref, w2_ref, b2_ref, o_ref):
    # alpha_ref: (1, 1)      f32 SMEM  (PReLU slope; 0.0 == ReLU)
    # x_ref:     (tbr, W)    f32 VMEM  (P batch rows packed per row, streamed)
    # w1_ref:    (W, Hw)     f32 VMEM  (kron(I_P, W1), resident)
    # b1_ref:    (1, Hw)     f32 VMEM
    # w2_ref:    (Hw, Cw)    f32 VMEM  (kron(I_P, W2), resident)
    # b2_ref:    (1, Cw)     f32 VMEM
    # o_ref:     (tbr, Cw)   f32 VMEM  (packed output, streamed)
    a = alpha_ref[0, 0]
    h = jnp.dot(x_ref[...], w1_ref[...], preferred_element_type=jnp.float32)
    h = h + b1_ref[...]
    h = jnp.where(h > 0, h, a * h)                         # PReLU
    y = jnp.dot(h, w2_ref[...], preferred_element_type=jnp.float32)
    o_ref[...] = y + b2_ref[...]


def generator_forward(x, w1, b1, alpha, w2, b2, *, activation="PReLU",
                      tile_batch=32768):
    """x: [B, latent_dim] f32 -> [B, output_dim] f32 (Generator.forward)."""
    if activation not in ("PReLU", "ReLU"):
        raise ValueError(f"unsupported activation: {activation}")
    B, L = x.shape
    H = w1.shape[1]
    C = w2.shape[1]
    Hp = _round_up(H, 8)                                   # 15 -> 16

    if activation == "ReLU":
        alpha = 0.0                                        # ReLU == PReLU(0), exact

    # Pack P batch rows per 128-lane row (free row-major reshape).
    P = max(1, 128 // L)
    W = P * L
    Hw = P * Hp
    Cw = P * C

    x = x.astype(jnp.float32)
    rows = pl.cdiv(B, P)
    rows_pad = _round_up(max(rows, 8), 8)
    if rows_pad * P != B:
        # Ragged batch only: zero-pad (small copy). Aligned batches reshape for free.
        x = jnp.zeros((rows_pad * P, L), jnp.float32).at[:B].set(x)
    xp = x.reshape(rows_pad, W)

    # Tiny resident operands (f32): hidden zero-padded 15->16, then expanded to
    # block-diagonal so the packed matmuls are ordinary GEMMs.
    eye = jnp.eye(P, dtype=jnp.float32)
    w1p = jnp.zeros((L, Hp), jnp.float32).at[:, :H].set(w1.astype(jnp.float32))
    w2p = jnp.zeros((Hp, C), jnp.float32).at[:H, :].set(w2.astype(jnp.float32))
    b1p = jnp.zeros((Hp,), jnp.float32).at[:H].set(b1.astype(jnp.float32))
    w1bd = jnp.kron(eye, w1p)                              # (W,  Hw)
    w2bd = jnp.kron(eye, w2p)                              # (Hw, Cw)
    b1bd = jnp.tile(b1p, P).reshape(1, Hw)
    b2bd = jnp.tile(b2.astype(jnp.float32), P).reshape(1, Cw)
    alpha2d = jnp.asarray(alpha, jnp.float32).reshape(1, 1)

    # Batch-row tile: VMEM budget (x/out double buffers + hidden temporaries,
    # lane-padded to 128), capped by tile_batch, clamped to keep >= 2 grid
    # steps (v7x megacore) when there is enough work.
    lanes = lambda n: _round_up(max(n, 1), 128)
    bytes_per_row = 4 * (2 * lanes(W) + 2 * lanes(Cw) + 4 * lanes(Hw))
    tbr = _VMEM_BUDGET // bytes_per_row
    tbr = min(tbr, max(1, tile_batch // P))
    tbr = min(tbr, _round_up(pl.cdiv(rows_pad, 2), 8))
    tbr = max(8, tbr // 8 * 8)
    grid = (pl.cdiv(rows_pad, tbr),)

    vmem = pltpu.MemorySpace.VMEM
    smem = pltpu.MemorySpace.SMEM

    cost = pl.CostEstimate(
        flops=2 * B * (L * H + H * C),
        transcendentals=0,
        bytes_accessed=4 * (B * L + B * C + W * Hw + Hw * Cw + Hw + Cw),
    )

    yp = pl.pallas_call(
        generator_kernel,
        out_shape=jax.ShapeDtypeStruct((rows_pad, Cw), jnp.float32),
        grid=grid,
        in_specs=[
            pl.BlockSpec((1, 1), lambda i: (0, 0), memory_space=smem),    # alpha
            pl.BlockSpec((tbr, W), lambda i: (i, 0), memory_space=vmem),  # packed x (streamed)
            pl.BlockSpec((W, Hw), lambda i: (0, 0), memory_space=vmem),   # kron(I, W1) resident
            pl.BlockSpec((1, Hw), lambda i: (0, 0), memory_space=vmem),   # b1
            pl.BlockSpec((Hw, Cw), lambda i: (0, 0), memory_space=vmem),  # kron(I, W2) resident
            pl.BlockSpec((1, Cw), lambda i: (0, 0), memory_space=vmem),   # b2
        ],
        out_specs=pl.BlockSpec((tbr, Cw), lambda i: (i, 0), memory_space=vmem),
        compiler_params=pltpu.CompilerParams(
            dimension_semantics=("parallel",),
            vmem_limit_bytes=_VMEM_LIMIT),
        cost_estimate=cost,
    )(alpha2d, xp, w1bd, b1bd, w2bd, b2bd)

    # Free row-major reshape back to the consumer layout [B, C].
    return yp.reshape(rows_pad * P, C)[:B]


def init_params(key, latent_dim, output_dim=2):
    """PyTorch-default-style init (uniform +/- 1/sqrt(fan_in)); alpha=0.25."""
    k1, k2, k3, k4 = jax.random.split(key, 4)
    bound1 = 1.0 / jnp.sqrt(latent_dim)
    w1 = jax.random.uniform(k1, (latent_dim, HIDDEN), jnp.float32, -bound1, bound1)
    b1 = jax.random.uniform(k2, (HIDDEN,), jnp.float32, -bound1, bound1)
    bound2 = 1.0 / jnp.sqrt(HIDDEN)
    w2 = jax.random.uniform(k3, (HIDDEN, output_dim), jnp.float32, -bound2, bound2)
    b2 = jax.random.uniform(k4, (output_dim,), jnp.float32, -bound2, bound2)
    alpha = jnp.float32(0.25)                              # nn.PReLU() default
    return w1, b1, alpha, w2, b2


def reference_forward(x, w1, b1, alpha, w2, b2, activation="PReLU"):
    h = jnp.dot(x, w1) + b1
    if activation == "ReLU":
        h = jnp.maximum(h, 0.0)
    else:
        h = jnp.where(h > 0, h, alpha * h)
    return jnp.dot(h, w2) + b2


if __name__ == "__main__":
    key = jax.random.PRNGKey(0)
    kx, kp = jax.random.split(key)

    batch, latent_dim, output_dim = 8, 32, 2
    x = jax.random.normal(kx, (batch, latent_dim), jnp.float32)
    w1, b1, alpha, w2, b2 = init_params(kp, latent_dim, output_dim)

    # PReLU path
    out = generator_forward(x, w1, b1, alpha, w2, b2, activation="PReLU")
    out = jax.block_until_ready(out)
    ref = reference_forward(x, w1, b1, alpha, w2, b2, activation="PReLU")
    assert out.shape == (batch, output_dim)
    assert jnp.allclose(out, ref, atol=1e-2, rtol=1e-2), float(
        jnp.max(jnp.abs(out - ref)))

    # ReLU path (alpha ignored)
    out_r = generator_forward(x, w1, b1, alpha, w2, b2, activation="ReLU")
    out_r = jax.block_until_ready(out_r)
    ref_r = reference_forward(x, w1, b1, alpha, w2, b2, activation="ReLU")
    assert jnp.allclose(out_r, ref_r, atol=1e-2, rtol=1e-2), float(
        jnp.max(jnp.abs(out_r - ref_r)))

    print("KERNEL_OK")
</pallas_src>

<mosaic_0001>
module attributes {stable_mosaic.version = 11 : i64} {
  func.func @generator_kernel(%arg0: i32, %arg1: memref<1x1xf32, #tpu.memory_space<smem>>, %arg2: memref<8x128xf32, #tpu.memory_space<vmem>>, %arg3: memref<128x64xf32, #tpu.memory_space<vmem>>, %arg4: memref<1x64xf32, #tpu.memory_space<vmem>>, %arg5: memref<64x8xf32, #tpu.memory_space<vmem>>, %arg6: memref<1x8xf32, #tpu.memory_space<vmem>>, %arg7: memref<8x8xf32, #tpu.memory_space<vmem>>) attributes {dimension_semantics = [#tpu.dimension_semantics<parallel>], iteration_bounds = array<i64: 1>, scalar_prefetch = 0 : i64, scratch_operands = 0 : i64, tpu.core_type = #tpu.core_type<tc>, window_params = [{transform_indices = @transform_0, window_bounds = array<i64: 1, 1>}, {transform_indices = @transform_1, window_bounds = array<i64: 8, 128>}, {pipeline_mode = #tpu.pipeline_mode<synchronous>, transform_indices = @transform_2, window_bounds = array<i64: 128, 64>}, {pipeline_mode = #tpu.pipeline_mode<synchronous>, transform_indices = @transform_3, window_bounds = array<i64: 1, 64>}, {pipeline_mode = #tpu.pipeline_mode<synchronous>, transform_indices = @transform_4, window_bounds = array<i64: 64, 8>}, {pipeline_mode = #tpu.pipeline_mode<synchronous>, transform_indices = @transform_5, window_bounds = array<i64: 1, 8>}, {transform_indices = @transform_6, window_bounds = array<i64: 8, 8>}]} {
    %c0 = arith.constant 0 : index
    %c0_0 = arith.constant 0 : index
    %0 = memref.load %arg1[%c0, %c0_0] : memref<1x1xf32, #tpu.memory_space<smem>>
    %c0_1 = arith.constant 0 : index
    %c0_2 = arith.constant 0 : index
    %1 = vector.load %arg2[%c0_1, %c0_2] : memref<8x128xf32, #tpu.memory_space<vmem>>, vector<8x128xf32>
    %c0_3 = arith.constant 0 : index
    %c0_4 = arith.constant 0 : index
    %2 = vector.load %arg3[%c0_3, %c0_4] : memref<128x64xf32, #tpu.memory_space<vmem>>, vector<128x64xf32>
    %cst = arith.constant dense<0.000000e+00> : vector<8x64xf32>
    %3 = tpu.matmul %1, %2, %cst {dimension_numbers = #tpu.dot_dimension_numbers<[1], [0], [0], [1], [0, 0, 1, 1], [], []>} : vector<8x128xf32>, vector<128x64xf32>, vector<8x64xf32> -> vector<8x64xf32>
    %c0_5 = arith.constant 0 : index
    %c0_6 = arith.constant 0 : index
    %4 = vector.load %arg4[%c0_5, %c0_6] : memref<1x64xf32, #tpu.memory_space<vmem>>, vector<1x64xf32>
    %5 = vector.broadcast %4 : vector<1x64xf32> to vector<8x64xf32>
    %6 = arith.addf %3, %5 : vector<8x64xf32>
    %cst_7 = arith.constant 0.000000e+00 : f32
    %7 = vector.broadcast %cst_7 : f32 to vector<8x64xf32>
    %8 = arith.cmpf ogt, %6, %7 : vector<8x64xf32>
    %9 = vector.broadcast %0 : f32 to vector<8x64xf32>
    %10 = arith.mulf %9, %6 : vector<8x64xf32>
    %11 = arith.select %8, %6, %10 : vector<8x64xi1>, vector<8x64xf32>
    %c0_8 = arith.constant 0 : index
    %c0_9 = arith.constant 0 : index
    %12 = vector.load %arg5[%c0_8, %c0_9] : memref<64x8xf32, #tpu.memory_space<vmem>>, vector<64x8xf32>
    %cst_10 = arith.constant dense<0.000000e+00> : vector<8x8xf32>
    %13 = tpu.matmul %11, %12, %cst_10 {dimension_numbers = #tpu.dot_dimension_numbers<[1], [0], [0], [1], [0, 0, 1, 1], [], []>} : vector<8x64xf32>, vector<64x8xf32>, vector<8x8xf32> -> vector<8x8xf32>
    %c0_11 = arith.constant 0 : index
    %c0_12 = arith.constant 0 : index
    %14 = vector.load %arg6[%c0_11, %c0_12] : memref<1x8xf32, #tpu.memory_space<vmem>>, vector<1x8xf32>
    %15 = vector.broadcast %14 : vector<1x8xf32> to vector<8x8xf32>
    %16 = arith.addf %13, %15 : vector<8x8xf32>
    %c0_13 = arith.constant 0 : index
    %c0_14 = arith.constant 0 : index
    %17 = vector.load %arg7[%c0_13, %c0_14] : memref<8x8xf32, #tpu.memory_space<vmem>>, vector<8x8xf32>
    tpu.vector_store %arg7[%c0_13, %c0_14], %16 {strides = array<i32>} : memref<8x8xf32, #tpu.memory_space<vmem>>, vector<8x8xf32>,
    return
  }
  func.func @transform_0(%arg0: i32) -> (i32, i32) {
    %c0_i32 = arith.constant 0 : i32
    %c0_i32_0 = arith.constant 0 : i32
    %c0_i32_1 = arith.constant 0 : i32
    return %c0_i32, %c0_i32_0 : i32, i32
  }
  func.func @transform_1(%arg0: i32) -> (i32, i32) {
    %c0_i32 = arith.constant 0 : i32
    %c0_i32_0 = arith.constant 0 : i32
    return %arg0, %c0_i32 : i32, i32
  }
  func.func @transform_2(%arg0: i32) -> (i32, i32) {
    %c0_i32 = arith.constant 0 : i32
    %c0_i32_0 = arith.constant 0 : i32
    %c0_i32_1 = arith.constant 0 : i32
    return %c0_i32, %c0_i32_0 : i32, i32
  }
  func.func @transform_3(%arg0: i32) -> (i32, i32) {
    %c0_i32 = arith.constant 0 : i32
    %c0_i32_0 = arith.constant 0 : i32
    %c0_i32_1 = arith.constant 0 : i32
    return %c0_i32, %c0_i32_0 : i32, i32
  }
  func.func @transform_4(%arg0: i32) -> (i32, i32) {
    %c0_i32 = arith.constant 0 : i32
    %c0_i32_0 = arith.constant 0 : i32
    %c0_i32_1 = arith.constant 0 : i32
    return %c0_i32, %c0_i32_0 : i32, i32
  }
  func.func @transform_5(%arg0: i32) -> (i32, i32) {
    %c0_i32 = arith.constant 0 : i32
    %c0_i32_0 = arith.constant 0 : i32
    %c0_i32_1 = arith.constant 0 : i32
    return %c0_i32, %c0_i32_0 : i32, i32
  }
  func.func @transform_6(%arg0: i32) -> (i32, i32) {
    %c0_i32 = arith.constant 0 : i32
    %c0_i32_0 = arith.constant 0 : i32
    return %arg0, %c0_i32 : i32, i32
  }
}

</mosaic_0001>

<llo_original>
// kernel: tpu_custom_call.1
$region0: #{tpu_custom_call.1}
  #allocation0 [shape = 'u32[]', space=smem, size = 0x4, offset = 0x4, fixed_abs, tag = 'smem constant byte address 0x4 - core index']
  #allocation1 [shape = 'u32[144,128]{1,0:T(1,128)}', space=vmem, size = 0x12000, scoped, tag = 'internal scratch']
  #allocation2 [shape = 'f32[1,1]{1,0:T(1,128)S(6)}', space=smem, size = 0x200, scoped, tag = 'scoped memory for tpu_custom_call.1']
  %s0 = inlined_call_operand.<no memory space> [shape: f32[1,1], index: 0, kind: input, shape index: {}]
  %s1 = inlined_call_operand.vmem [shape: f32[8,128], index: 1, kind: input, shape index: {}]
  %s2 = inlined_call_operand.vmem [shape: f32[128,64], index: 2, kind: input, shape index: {}]
  %s3 = inlined_call_operand.vmem [shape: f32[1,64], index: 3, kind: input, shape index: {}]
  %s4 = inlined_call_operand.vmem [shape: f32[64,8], index: 4, kind: input, shape index: {}]
  %s5 = inlined_call_operand.vmem [shape: f32[1,8], index: 5, kind: input, shape index: {}]
  %s6 = inlined_call_operand.hbm [shape: f32[8,8], index: 6, kind: output, shape index: {}]
  %s7 = sld [smem:[#allocation0]]
  $region34: #{tpu_custom_call.1} parent=0
    _
  %s9 = ssub.s32 1, %s7
  %s10 = scalar_select 0, %s9, %s7
  %11 = sst [smem:[#allocation2]] %s0
  $region1: #{tpu_custom_call.1} parent=0
    #allocation3 [shape = 'u8[4096]{0}', space=vmem, size = 0x1000, scoped, tag = 'output window, operand 0, single buffered']
    #allocation4 [shape = 's32[1]{0}', space=sflag, size = 0x4, scoped, tag = 'scoped memory for tpu_custom_call.1']
    %12 = vsyncpa [#allocation4], 0
    // Predicated region
    $region2: #{tpu_custom_call.1} parent=1 // pred_check
      _
    $region3: #{tpu_custom_call.1} parent=1 // pred_check_branch
      %14 = sbr.rel (0) target = $region5
    $region4: #{tpu_custom_call.1} parent=1 // pred_region
      _
    $region5: #{tpu_custom_call.1} parent=1 // pred_fallthru
      _
    // Predicated region
    $region6: #{tpu_custom_call.1} parent=1 // pred_check
      _
    $region7: #{tpu_custom_call.1} parent=1 // pred_check_branch
      %16 = sbr.rel (0) target = $region9
    $region8: #{tpu_custom_call.1} parent=1 // pred_region
      _
    $region9: #{tpu_custom_call.1} parent=1 // pred_fallthru
      _
    // Predicated region
    $region10: #{tpu_custom_call.1} parent=1 // pred_check
      _
    $region11: #{tpu_custom_call.1} parent=1 // pred_check_branch
      %18 = sbr.rel (0) target = $region13
    $region12: #{tpu_custom_call.1} parent=1 // pred_region
      _
    $region13: #{tpu_custom_call.1} parent=1 // pred_fallthru
      _
    // Predicated region
    $region14: #{tpu_custom_call.1} parent=1 // pred_check
      _
    $region15: #{tpu_custom_call.1} parent=1 // pred_check_branch
      %20 = sbr.rel (0) target = $region17
    $region16: #{tpu_custom_call.1} parent=1 // pred_region
      _
    $region17: #{tpu_custom_call.1} parent=1 // pred_fallthru
      _
    // Predicated region
    $region18: #{tpu_custom_call.1} parent=1 // pred_check
      _
    $region19: #{tpu_custom_call.1} parent=1 // pred_check_branch
      %22 = sbr.rel (0) target = $region21
    $region20: #{tpu_custom_call.1} parent=1 // pred_region
      _
    $region21: #{tpu_custom_call.1} parent=1 // pred_fallthru
      _
    // Predicated region
    $region22: #{tpu_custom_call.1} parent=1 // pred_check
      _
    $region23: #{tpu_custom_call.1} parent=1 // pred_check_branch
      %24 = sbr.rel (0) target = $region25
    $region24: #{tpu_custom_call.1} parent=1 // pred_region
      _
    $region25: #{tpu_custom_call.1} parent=1 // pred_fallthru
      _
    %s25 = sld [smem:[#allocation2]]
    %v26 = vld [vmem:[%s1] sm:$0xff]
    %v27 = vld [vmem:[%s2] sm:$0xff]
    %v28 = vld [vmem:[%s2 + $0x8] sm:$0xff]
    %v29 = vld [vmem:[%s2 + $0x10] sm:$0xff]
    %v30 = vld [vmem:[%s2 + $0x18] sm:$0xff]
    %v31 = vld [vmem:[%s2 + $0x20] sm:$0xff]
    %v32 = vld [vmem:[%s2 + $0x28] sm:$0xff]
    %v33 = vld [vmem:[%s2 + $0x30] sm:$0xff]
    %v34 = vld [vmem:[%s2 + $0x38] sm:$0xff]
    %v35 = vld [vmem:[%s2 + $0x40] sm:$0xff]
    %v36 = vld [vmem:[%s2 + $0x48] sm:$0xff]
    %v37 = vld [vmem:[%s2 + $0x50] sm:$0xff]
    %v38 = vld [vmem:[%s2 + $0x58] sm:$0xff]
    %v39 = vld [vmem:[%s2 + $0x60] sm:$0xff]
    %v40 = vld [vmem:[%s2 + $0x68] sm:$0xff]
    %v41 = vld [vmem:[%s2 + $0x70] sm:$0xff]
    %v42 = vld [vmem:[%s2 + $0x78] sm:$0xff]
    %v43 = vld [vmem:[%s3] sm:$0x1]
    %v45 = vlaneseq
    %v46 = vshrl.u32 %v45, 7
    %v47 = vsub.s32 0, %v46
    %v48 = vrot.slane %v43, %v47
    %50 = vmatprep.subr.mxu0 0.0
    %51 = vmatpush1.msra.mxu0 %v42
    %52 = vmatprep.subr.mxu0 0.0
    %53 = vmatpush1.msra.mxu0 %v41
    %54 = vmatprep.subr.mxu0 0.0
    %55 = vmatpush1.msra.mxu0 %v40
    %56 = vmatprep.subr.mxu0 0.0
    %57 = vmatpush1.msra.mxu0 %v39
    %58 = vmatprep.subr.mxu0 0.0
    %59 = vmatpush1.msra.mxu0 %v38
    %60 = vmatprep.subr.mxu0 0.0
    %61 = vmatpush1.msra.mxu0 %v37
    %62 = vmatprep.subr.mxu0 0.0
    %63 = vmatpush1.msra.mxu0 %v36
    %64 = vmatprep.subr.mxu0 0.0
    %65 = vmatpush1.msra.mxu0 %v35
    %66 = vmatprep.subr.mxu0 0.0
    %67 = vmatpush1.msra.mxu0 %v34
    %68 = vmatprep.subr.mxu0 0.0
    %69 = vmatpush1.msra.mxu0 %v33
    %70 = vmatprep.subr.mxu0 0.0
    %71 = vmatpush1.msra.mxu0 %v32
    %72 = vmatprep.subr.mxu0 0.0
    %73 = vmatpush1.msra.mxu0 %v31
    %74 = vmatprep.subr.mxu0 0.0
    %75 = vmatpush1.msra.mxu0 %v30
    %76 = vmatprep.subr.mxu0 0.0
    %77 = vmatpush1.msra.mxu0 %v29
    %78 = vmatprep.subr.mxu0 0.0
    %79 = vmatpush1.msra.mxu0 %v28
    %80 = vmatprep.subr.mxu0 0.0
    %81 = vmatpush1.msra.mxu0 %v27
    %82 = vmatprep.subr.mxu0 0.0
    %83 = vmatpush2.msra.mxu0 0.0
    %84 = vmatprep.subr.mxu0 0.0
    %85 = vmatpush2.msra.mxu0 0.0
    %86 = vmatprep.subr.mxu0 0.0
    %87 = vmatpush2.msra.mxu0 0.0
    %88 = vmatprep.subr.mxu0 0.0
    %89 = vmatpush2.msra.mxu0 0.0
    %90 = vmatprep.subr.mxu0 0.0
    %91 = vmatpush2.msra.mxu0 0.0
    %92 = vmatprep.subr.mxu0 0.0
    %93 = vmatpush2.msra.mxu0 0.0
    %94 = vmatprep.subr.mxu0 0.0
    %95 = vmatpush2.msra.mxu0 0.0
    %96 = vmatprep.subr.mxu0 0.0
    %97 = vmatpush2.msra.mxu0 0.0
    %98 = vmatprep.subr.mxu0 0.0
    %99 = vmatpush2.msra.mxu0 0.0
    %100 = vmatprep.subr.mxu0 0.0
    %101 = vmatpush2.msra.mxu0 0.0
    %102 = vmatprep.subr.mxu0 0.0
    %103 = vmatpush2.msra.mxu0 0.0
    %104 = vmatprep.subr.mxu0 0.0
    %105 = vmatpush2.msra.mxu0 0.0
    %106 = vmatprep.subr.mxu0 0.0
    %107 = vmatpush2.msra.mxu0 0.0
    %108 = vmatprep.subr.mxu0 0.0
    %109 = vmatpush2.msra.mxu0 0.0
    %110 = vmatprep.subr.mxu0 0.0
    %111 = vmatpush2.msra.mxu0 0.0
    %112 = vmatprep.subr.mxu0 0.0
    %113 = vmatpush2.msra.mxu0 0.0
    %114 = vmatprep.mubr.f32.mxu0 0.0
    %115 = vmatmul.mubr.f32.gmra.mxu0 %v26
    %v116 = vpop.f32.mrf.mxu0
    %v117 = vadd.f32 %v48, %v116
    %v118 = vpop.f32.mrf.mxu0
    %119 = vdwg.mxu0
    %vm120 = vcmp.gt.f32.partialorder %v117, 0.0
    %v121 = vstv %s25
    %v122 = vmul.f32 %v121, %v117
    %v123 = vsel %vm120, %v117, %v122
    %v124 = vld [vmem:[%s4] sm:$0xff]
    %v125 = vld [vmem:[%s4 + $0x8] sm:$0xff]
    %v126 = vld [vmem:[%s4 + $0x10] sm:$0xff]
    %v127 = vld [vmem:[%s4 + $0x18] sm:$0xff]
    %v128 = vld [vmem:[%s4 + $0x20] sm:$0xff]
    %v129 = vld [vmem:[%s4 + $0x28] sm:$0xff]
    %v130 = vld [vmem:[%s4 + $0x30] sm:$0xff]
    %v131 = vld [vmem:[%s4 + $0x38] sm:$0xff]
    %v132 = vld [vmem:[%s5] sm:$0x1]
    %v134 = vlaneseq
    %v135 = vshrl.u32 %v134, 7
    %v136 = vsub.s32 0, %v135
    %v137 = vrot.slane %v132, %v136
    %vm139 = vcmask 523264
    %v141 = vsel %vm139, %v123, 0
    %143 = vmatprep.subr.mxu0 0.0
    %144 = vmatpush1.msra.mxu0 0.0
    %145 = vmatprep.subr.mxu0 0.0
    %146 = vmatpush1.msra.mxu0 0.0
    %147 = vmatprep.subr.mxu0 0.0
    %148 = vmatpush1.msra.mxu0 0.0
    %149 = vmatprep.subr.mxu0 0.0
    %150 = vmatpush1.msra.mxu0 0.0
    %151 = vmatprep.subr.mxu0 0.0
    %152 = vmatpush1.msra.mxu0 0.0
    %153 = vmatprep.subr.mxu0 0.0
    %154 = vmatpush1.msra.mxu0 0.0
    %155 = vmatprep.subr.mxu0 0.0
    %156 = vmatpush1.msra.mxu0 0.0
    %157 = vmatprep.subr.mxu0 0.0
    %158 = vmatpush1.msra.mxu0 0.0
    %159 = vmatprep.subr.mxu0 0.0
    %160 = vmatpush1.msra.mxu0 %v131
    %161 = vmatprep.subr.mxu0 0.0
    %162 = vmatpush1.msra.mxu0 %v130
    %163 = vmatprep.subr.mxu0 0.0
    %164 = vmatpush1.msra.mxu0 %v129
    %165 = vmatprep.subr.mxu0 0.0
    %166 = vmatpush1.msra.mxu0 %v128
    %167 = vmatprep.subr.mxu0 0.0
    %168 = vmatpush1.msra.mxu0 %v127
    %169 = vmatprep.subr.mxu0 0.0
    %170 = vmatpush1.msra.mxu0 %v126
    %171 = vmatprep.subr.mxu0 0.0
    %172 = vmatpush1.msra.mxu0 %v125
    %173 = vmatprep.subr.mxu0 0.0
    %174 = vmatpush1.msra.mxu0 %v124
    %175 = vmatprep.subr.mxu0 0.0
    %176 = vmatpush2.msra.mxu0 0.0
    %177 = vmatprep.subr.mxu0 0.0
    %178 = vmatpush2.msra.mxu0 0.0
    %179 = vmatprep.subr.mxu0 0.0
    %180 = vmatpush2.msra.mxu0 0.0
    %181 = vmatprep.subr.mxu0 0.0
    %182 = vmatpush2.msra.mxu0 0.0
    %183 = vmatprep.subr.mxu0 0.0
    %184 = vmatpush2.msra.mxu0 0.0
    %185 = vmatprep.subr.mxu0 0.0
    %186 = vmatpush2.msra.mxu0 0.0
    %187 = vmatprep.subr.mxu0 0.0
    %188 = vmatpush2.msra.mxu0 0.0
    %189 = vmatprep.subr.mxu0 0.0
    %190 = vmatpush2.msra.mxu0 0.0
    %191 = vmatprep.subr.mxu0 0.0
    %192 = vmatpush2.msra.mxu0 0.0
    %193 = vmatprep.subr.mxu0 0.0
    %194 = vmatpush2.msra.mxu0 0.0
    %195 = vmatprep.subr.mxu0 0.0
    %196 = vmatpush2.msra.mxu0 0.0
    %197 = vmatprep.subr.mxu0 0.0
    %198 = vmatpush2.msra.mxu0 0.0
    %199 = vmatprep.subr.mxu0 0.0
    %200 = vmatpush2.msra.mxu0 0.0
    %201 = vmatprep.subr.mxu0 0.0
    %202 = vmatpush2.msra.mxu0 0.0
    %203 = vmatprep.subr.mxu0 0.0
    %204 = vmatpush2.msra.mxu0 0.0
    %205 = vmatprep.subr.mxu0 0.0
    %206 = vmatpush2.msra.mxu0 0.0
    %207 = vmatprep.mubr.f32.mxu0 0.0
    %208 = vmatmul.mubr.f32.gmra.mxu0 %v141
    %v209 = vpop.f32.mrf.mxu0
    %v210 = vadd.f32 %v137, %v209
    %v211 = vpop.f32.mrf.mxu0
    %212 = vdwg.mxu0
    %vm213 = vcmask 64512
    %214 = vst.msk [vmem:[#allocation3] sm:$0xff] %vm213, %v210
    // Predicated region
    $region26: #{tpu_custom_call.1} parent=1 // pred_check
      _
    $region27: #{tpu_custom_call.1} parent=1 // pred_check_branch
      %216 = sbr.rel (0) target = $region29
    $region28: #{tpu_custom_call.1} parent=1 // pred_region
      %s218 = ssub.s32 128, 128
      %219 = vsyncadd [#allocation4], %s218
      %s221 = sshll.u32 [#allocation3], 4
      %s222 = int_to_ptr.vmem [resolvable:$true] %s221
      %224 = dma.vmem_to_hbm [thread:$0]  %s222, 128, %s6, [#allocation4]
    $region29: #{tpu_custom_call.1} parent=1 // pred_fallthru
      _
    // Predicated region
    $region30: #{tpu_custom_call.1} parent=1 // pred_check
      _
    $region31: #{tpu_custom_call.1} parent=1 // pred_check_branch
      %226 = sbr.rel (0) target = $region33
    $region32: #{tpu_custom_call.1} parent=1 // pred_region
      %227 = dma.done [#allocation4], 128
    $region33: #{tpu_custom_call.1} parent=1 // pred_fallthru
      _
    %228 = vsyncpa [#allocation4], 1

</llo_original>
